<compile_context>
chip_gen: v5e
topology: v5e:2x2
jax: 0.10.0
libtpu: 0.0.40
codegen_flags: <defaults>
</compile_context>

<pallas_src>
import jax
import jax.numpy as jnp
from jax.experimental import pallas as pl
from jax.experimental.pallas import tpu as pltpu


# torch nn.GELU() default is the exact erf form; the tanh approximation is
# ~1e-3 off and keeps the EUP path simple.  Flip to False if erf fidelity to
# the PyTorch module matters more than that last digit.
_GELU_APPROX = True

_VMEM_CAP_FALLBACK = 64 * 1024 * 1024  # v7x per-TC physical VMEM (most restrictive)


def _round_up(v, m):
    return (v + m - 1) // m * m


def _vmem_numbers():
    """Per-generation VMEM numbers (budget for tile sizing, Mosaic limit)."""
    cap = _VMEM_CAP_FALLBACK
    try:
        cap = int(pltpu.get_tpu_info().vmem_capacity_bytes)
    except Exception:
        pass
    budget = (cap * 3) // 5   # ~60%: v5e/v6e (128 MiB) -> ~76 MiB, v7x (64 MiB) -> ~38 MiB
    limit = (cap * 3) // 4    # ~75%: v5e/v6e -> 96 MiB, v7x -> 48 MiB
    return budget, limit


def _pick_tm(m_rows, dp, hp, vmem_budget_bytes):
    """Row-tile size that fits the VMEM budget (0 => weights don't fit)."""
    # Weights/biases: bf16, SINGLE-buffered (constant index_map + Buffered(1)).
    weight_bytes = 2 * (dp * hp + hp * dp) + 4 * (hp + dp)
    # Per-row bytes: double-buffered f32 x tile + double-buffered f32 out tile
    # + in-kernel temporaries (bf16 x cast, f32 h, bf16 h cast, f32 y).
    per_row_bytes = 8 * dp + 8 * dp + 2 * dp + 4 * hp + 2 * hp + 4 * dp
    avail = vmem_budget_bytes - weight_bytes
    if avail < 8 * per_row_bytes:
        return 0
    tm = (avail // per_row_bytes // 8) * 8
    return min(tm, 2048)


def _residual_mlp_kernel(x_ref, w1_ref, b1_ref, w2_ref, b2_ref, o_ref):
    # x_ref : (TM, Dp)        w1_ref: (Dp, Hp) bf16   b1_ref: (1, Hp) f32
    # w2_ref: (Hp, Dp) bf16   b2_ref: (1, Dp)  f32    o_ref : (TM, Dp)
    x = x_ref[...]
    xf = x.astype(jnp.float32)                         # f32 skip path
    h = jnp.dot(x.astype(jnp.bfloat16), w1_ref[...],
                preferred_element_type=jnp.float32) + b1_ref[...]
    h = jax.nn.gelu(h, approximate=_GELU_APPROX)       # EUP
    y = jnp.dot(h.astype(jnp.bfloat16), w2_ref[...],
                preferred_element_type=jnp.float32) + b2_ref[...]
    o_ref[...] = (y + xf).astype(o_ref.dtype)          # residual add in f32


def _residual_mlp_ref(x, w1, b1, w2, b2):
    """Plain-XLA reference / fallback of Residual(channel-MLP)."""
    return jax.nn.gelu(x @ w1 + b1, approximate=_GELU_APPROX) @ w2 + b2 + x


@jax.jit
def residual_mlp_pallas(x, w1, b1, w2, b2):
    """x: (B, N, D); returns fn(x) + x with fn = GELU channel-MLP (Pallas)."""
    B, N, D = x.shape
    H = w1.shape[1]
    M = B * N

    # Lane-dense padding: last dims multiples of 128 -> unmasked vst, full
    # MXU column / VPU lane occupancy.
    # TODO(synk): for compute-bound cases on v6e/v7x (H >~ 1k) consider
    # 256-aligned Dp/Hp to fill the 2x256^2 MXU; kept at 128 to avoid extra
    # HBM traffic in the (common) memory-bound regime.
    Dp = _round_up(D, 128)
    Hp = _round_up(H, 128)

    budget, vmem_limit = _vmem_numbers()
    TM = _pick_tm(M, Dp, Hp, budget)
    if TM == 0:
        # TODO(synk): weights exceed the VMEM-residency budget (hit first on
        # v7x's 64 MiB); proper fix is an H-tiled second "arbitrary" grid axis
        # with an f32 accumulator scratch instead of shrinking TM.  Fall back
        # to plain XLA for now.
        return _residual_mlp_ref(x, w1, b1, w2, b2)

    # Keep >= ~8 grid steps (feeds both v7x TensorCores via the "parallel"
    # axis and keeps the software pipeline busy) but never drop below 256 rows.
    steps_cap = _round_up(max(-(-M // 8), 1), 8)
    TM = min(TM, max(256, steps_cap))
    TM = max(8, min(TM, _round_up(M, 8)))
    Mp = _round_up(M, TM)

    # Skip the pad round-trip when shapes are already aligned (static checks).
    x2d = x.reshape(M, D)
    if (Mp, Dp) != (M, D):
        # Zero padding keeps padded output lanes exactly zero (zero weight
        # cols/rows + zero bias entries + zero x lanes) -> clean residual.
        x2d = jnp.pad(x2d, ((0, Mp - M), (0, Dp - D)))
    w1p = w1 if (Dp, Hp) == (D, H) else jnp.pad(w1, ((0, Dp - D), (0, Hp - H)))
    w2p = w2 if (Dp, Hp) == (D, H) else jnp.pad(w2, ((0, Hp - H), (0, Dp - D)))
    b1p = b1 if Hp == H else jnp.pad(b1, ((0, Hp - H),))
    b2p = b2 if Dp == D else jnp.pad(b2, ((0, Dp - D),))
    w1p = w1p.astype(jnp.bfloat16)                      # MXU in bf16, f32 acc
    w2p = w2p.astype(jnp.bfloat16)
    b1p = b1p.reshape(1, Hp).astype(jnp.float32)
    b2p = b2p.reshape(1, Dp).astype(jnp.float32)

    cost = pl.CostEstimate(
        flops=4 * Mp * Dp * Hp,                          # two matmuls
        transcendentals=Mp * Hp,                         # GELU
        bytes_accessed=(2 * Mp * Dp * x.dtype.itemsize   # x in + out
                        + 2 * 2 * Dp * Hp                # both bf16 weights
                        + 4 * (Hp + Dp)),                # biases
    )

    resident = pl.Buffered(1)   # constant index_map -> no double buffering

    out2d = pl.pallas_call(
        _residual_mlp_kernel,
        out_shape=jax.ShapeDtypeStruct((Mp, Dp), x.dtype),
        grid_spec=pl.GridSpec(
            grid=(Mp // TM,),
            in_specs=[
                pl.BlockSpec((TM, Dp), lambda i: (i, 0)),                        # x: pipelined
                pl.BlockSpec((Dp, Hp), lambda i: (0, 0), pipeline_mode=resident),  # W1 resident
                pl.BlockSpec((1, Hp), lambda i: (0, 0), pipeline_mode=resident),   # b1
                pl.BlockSpec((Hp, Dp), lambda i: (0, 0), pipeline_mode=resident),  # W2
                pl.BlockSpec((1, Dp), lambda i: (0, 0), pipeline_mode=resident),   # b2
            ],
            out_specs=pl.BlockSpec((TM, Dp), lambda i: (i, 0)),
        ),
        compiler_params=pltpu.CompilerParams(
            dimension_semantics=("parallel",),           # rows independent -> megacore
            vmem_limit_bytes=vmem_limit,
        ),
        cost_estimate=cost,
    )(x2d, w1p, b1p, w2p, b2p)

    if (Mp, Dp) != (M, D):
        out2d = out2d[:M, :D]
    return out2d.reshape(B, N, D)


@jax.jit
def residual_mlp(x, w1, b1, w2, b2):
    """Public entry: tiny problems go to plain XLA (pallas_call fixed overhead
    + pad HLOs dominate there); everything else uses the fused Pallas kernel."""
    B, N, D = x.shape
    H = w1.shape[1]
    M = B * N
    if M < 512 or (D < 128 and H < 128):
        return _residual_mlp_ref(x, w1, b1, w2, b2)
    return residual_mlp_pallas(x, w1, b1, w2, b2)


if __name__ == "__main__":
    # Small shapes: batch=2, seq(tokens)=8, hidden=32, mlp expansion hidden=64.
    B, N, D, H = 2, 8, 32, 64

    key = jax.random.PRNGKey(0)
    kx, k1, k2, k3, k4 = jax.random.split(key, 5)

    x = jax.random.normal(kx, (B, N, D), dtype=jnp.float32)
    # Deterministic synthetic parameters (no checkpoint load).
    w1 = jax.random.normal(k1, (D, H), dtype=jnp.float32) * (1.0 / D ** 0.5)
    b1 = jax.random.normal(k2, (H,), dtype=jnp.float32) * 0.01
    w2 = jax.random.normal(k3, (H, D), dtype=jnp.float32) * (1.0 / H ** 0.5)
    b2 = jax.random.normal(k4, (D,), dtype=jnp.float32) * 0.01

    # Exercise the Pallas kernel directly at the small demo shapes (the public
    # dispatcher would route a problem this tiny to the XLA fallback).
    out = residual_mlp_pallas(x, w1, b1, w2, b2)
    jax.block_until_ready(out)

    ref = _residual_mlp_ref(x, w1, b1, w2, b2)
    assert out.shape == x.shape
    # Tolerance accounts for bf16 MXU inputs (f32 accumulation & f32 skip).
    assert jnp.allclose(out, ref, atol=3e-2, rtol=3e-2), "pallas kernel mismatch vs reference"

    # Dispatcher sanity check (routes these tiny shapes to the XLA fallback).
    out2 = residual_mlp(x, w1, b1, w2, b2)
    jax.block_until_ready(out2)
    assert jnp.allclose(out2, ref, atol=3e-2, rtol=3e-2), "dispatcher mismatch vs reference"

    print("KERNEL_OK")
</pallas_src>

<mosaic_0001>
module attributes {stable_mosaic.version = 11 : i64} {
  func.func @_residual_mlp_kernel(%arg0: i32, %arg1: memref<16x128xf32, #tpu.memory_space<vmem>>, %arg2: memref<128x128xbf16, #tpu.memory_space<vmem>>, %arg3: memref<1x128xf32, #tpu.memory_space<vmem>>, %arg4: memref<128x128xbf16, #tpu.memory_space<vmem>>, %arg5: memref<1x128xf32, #tpu.memory_space<vmem>>, %arg6: memref<16x128xf32, #tpu.memory_space<vmem>>) attributes {dimension_semantics = [#tpu.dimension_semantics<parallel>], iteration_bounds = array<i64: 1>, scalar_prefetch = 0 : i64, scratch_operands = 0 : i64, tpu.core_type = #tpu.core_type<tc>, window_params = [{transform_indices = @transform_0, window_bounds = array<i64: 16, 128>}, {pipeline_mode = #tpu.pipeline_mode<synchronous>, transform_indices = @transform_1, window_bounds = array<i64: 128, 128>}, {pipeline_mode = #tpu.pipeline_mode<synchronous>, transform_indices = @transform_2, window_bounds = array<i64: 1, 128>}, {pipeline_mode = #tpu.pipeline_mode<synchronous>, transform_indices = @transform_3, window_bounds = array<i64: 128, 128>}, {pipeline_mode = #tpu.pipeline_mode<synchronous>, transform_indices = @transform_4, window_bounds = array<i64: 1, 128>}, {transform_indices = @transform_5, window_bounds = array<i64: 16, 128>}]} {
    %c0 = arith.constant 0 : index
    %c0_0 = arith.constant 0 : index
    %0 = vector.load %arg1[%c0, %c0_0] : memref<16x128xf32, #tpu.memory_space<vmem>>, vector<16x128xf32>
    %1 = arith.truncf %0 : vector<16x128xf32> to vector<16x128xbf16>
    %c0_1 = arith.constant 0 : index
    %c0_2 = arith.constant 0 : index
    %2 = vector.load %arg2[%c0_1, %c0_2] : memref<128x128xbf16, #tpu.memory_space<vmem>>, vector<128x128xbf16>
    %cst = arith.constant dense<0.000000e+00> : vector<16x128xf32>
    %3 = tpu.matmul %1, %2, %cst {dimension_numbers = #tpu.dot_dimension_numbers<[1], [0], [0], [1], [0, 0, 1, 1], [], []>} : vector<16x128xbf16>, vector<128x128xbf16>, vector<16x128xf32> -> vector<16x128xf32>
    %c0_3 = arith.constant 0 : index
    %c0_4 = arith.constant 0 : index
    %4 = vector.load %arg3[%c0_3, %c0_4] : memref<1x128xf32, #tpu.memory_space<vmem>>, vector<1x128xf32>
    %5 = vector.broadcast %4 : vector<1x128xf32> to vector<16x128xf32>
    %6 = arith.addf %3, %5 : vector<16x128xf32>
    %7 = arith.mulf %6, %6 : vector<16x128xf32>
    %8 = arith.mulf %6, %7 : vector<16x128xf32>
    %cst_5 = arith.constant 4.471500e-02 : f32
    %9 = vector.broadcast %cst_5 : f32 to vector<16x128xf32>
    %10 = arith.mulf %9, %8 : vector<16x128xf32>
    %11 = arith.addf %6, %10 : vector<16x128xf32>
    %cst_6 = arith.constant 0.797884583 : f32
    %12 = vector.broadcast %cst_6 : f32 to vector<16x128xf32>
    %13 = arith.mulf %12, %11 : vector<16x128xf32>
    %14 = math.tanh %13 : vector<16x128xf32>
    %cst_7 = arith.constant 1.000000e+00 : f32
    %15 = vector.broadcast %cst_7 : f32 to vector<16x128xf32>
    %16 = arith.addf %15, %14 : vector<16x128xf32>
    %cst_8 = arith.constant 5.000000e-01 : f32
    %17 = vector.broadcast %cst_8 : f32 to vector<16x128xf32>
    %18 = arith.mulf %17, %16 : vector<16x128xf32>
    %19 = arith.mulf %6, %18 : vector<16x128xf32>
    %20 = arith.truncf %19 : vector<16x128xf32> to vector<16x128xbf16>
    %c0_9 = arith.constant 0 : index
    %c0_10 = arith.constant 0 : index
    %21 = vector.load %arg4[%c0_9, %c0_10] : memref<128x128xbf16, #tpu.memory_space<vmem>>, vector<128x128xbf16>
    %cst_11 = arith.constant dense<0.000000e+00> : vector<16x128xf32>
    %22 = tpu.matmul %20, %21, %cst_11 {dimension_numbers = #tpu.dot_dimension_numbers<[1], [0], [0], [1], [0, 0, 1, 1], [], []>} : vector<16x128xbf16>, vector<128x128xbf16>, vector<16x128xf32> -> vector<16x128xf32>
    %c0_12 = arith.constant 0 : index
    %c0_13 = arith.constant 0 : index
    %23 = vector.load %arg5[%c0_12, %c0_13] : memref<1x128xf32, #tpu.memory_space<vmem>>, vector<1x128xf32>
    %24 = vector.broadcast %23 : vector<1x128xf32> to vector<16x128xf32>
    %25 = arith.addf %22, %24 : vector<16x128xf32>
    %26 = arith.addf %25, %0 : vector<16x128xf32>
    %c0_14 = arith.constant 0 : index
    %c0_15 = arith.constant 0 : index
    %27 = vector.load %arg6[%c0_14, %c0_15] : memref<16x128xf32, #tpu.memory_space<vmem>>, vector<16x128xf32>
    tpu.vector_store %arg6[%c0_14, %c0_15], %26 {strides = array<i32>} : memref<16x128xf32, #tpu.memory_space<vmem>>, vector<16x128xf32>,
    return
  }
  func.func @transform_0(%arg0: i32) -> (i32, i32) {
    %c0_i32 = arith.constant 0 : i32
    %c0_i32_0 = arith.constant 0 : i32
    return %arg0, %c0_i32 : i32, i32
  }
  func.func @transform_1(%arg0: i32) -> (i32, i32) {
    %c0_i32 = arith.constant 0 : i32
    %c0_i32_0 = arith.constant 0 : i32
    %c0_i32_1 = arith.constant 0 : i32
    return %c0_i32, %c0_i32_0 : i32, i32
  }
  func.func @transform_2(%arg0: i32) -> (i32, i32) {
    %c0_i32 = arith.constant 0 : i32
    %c0_i32_0 = arith.constant 0 : i32
    %c0_i32_1 = arith.constant 0 : i32
    return %c0_i32, %c0_i32_0 : i32, i32
  }
  func.func @transform_3(%arg0: i32) -> (i32, i32) {
    %c0_i32 = arith.constant 0 : i32
    %c0_i32_0 = arith.constant 0 : i32
    %c0_i32_1 = arith.constant 0 : i32
    return %c0_i32, %c0_i32_0 : i32, i32
  }
  func.func @transform_4(%arg0: i32) -> (i32, i32) {
    %c0_i32 = arith.constant 0 : i32
    %c0_i32_0 = arith.constant 0 : i32
    %c0_i32_1 = arith.constant 0 : i32
    return %c0_i32, %c0_i32_0 : i32, i32
  }
  func.func @transform_5(%arg0: i32) -> (i32, i32) {
    %c0_i32 = arith.constant 0 : i32
    %c0_i32_0 = arith.constant 0 : i32
    return %arg0, %c0_i32 : i32, i32
  }
}

</mosaic_0001>

<llo_original>
// kernel: residual_mlp_pallas.1
$region0: #{residual_mlp_pallas.1}
  #allocation0 [shape = 'u32[]', space=smem, size = 0x4, offset = 0x4, fixed_abs, tag = 'smem constant byte address 0x4 - core index']
  #allocation1 [shape = 'u32[72,128]{1,0:T(1,128)}', space=vmem, size = 0x9000, scoped, tag = 'internal scratch']
  %s0 = inlined_call_operand.vmem [shape: f32[16,128], index: 0, kind: input, shape index: {}]
  %s1 = inlined_call_operand.vmem [shape: bf16[128,128], index: 1, kind: input, shape index: {}]
  %s2 = inlined_call_operand.vmem [shape: f32[1,128], index: 2, kind: input, shape index: {}]
  %s3 = inlined_call_operand.vmem [shape: bf16[128,128], index: 3, kind: input, shape index: {}]
  %s4 = inlined_call_operand.vmem [shape: f32[1,128], index: 4, kind: input, shape index: {}]
  %s5 = inlined_call_operand.vmem [shape: f32[16,128], index: 5, kind: output, shape index: {}]
  %s6 = sld [smem:[#allocation0]]
  $region30: #{residual_mlp_pallas.1} parent=0
    _
  %s8 = ssub.s32 1, %s6
  %s9 = scalar_select 0, %s8, %s6
  // Predicated region
  $region2: #{residual_mlp_pallas.1} parent=0 // pred_check
    _
  $region3: #{residual_mlp_pallas.1} parent=0 // pred_check_branch
    %11 = sbr.rel (0) target = $region5
  $region4: #{residual_mlp_pallas.1} parent=0 // pred_region
    _
  $region5: #{residual_mlp_pallas.1} parent=0 // pred_fallthru
    _
  // Predicated region
  $region6: #{residual_mlp_pallas.1} parent=0 // pred_check
    _
  $region7: #{residual_mlp_pallas.1} parent=0 // pred_check_branch
    %13 = sbr.rel (0) target = $region9
  $region8: #{residual_mlp_pallas.1} parent=0 // pred_region
    _
  $region9: #{residual_mlp_pallas.1} parent=0 // pred_fallthru
    _
  // Predicated region
  $region10: #{residual_mlp_pallas.1} parent=0 // pred_check
    _
  $region11: #{residual_mlp_pallas.1} parent=0 // pred_check_branch
    %15 = sbr.rel (0) target = $region13
  $region12: #{residual_mlp_pallas.1} parent=0 // pred_region
    _
  $region13: #{residual_mlp_pallas.1} parent=0 // pred_fallthru
    _
  // Predicated region
  $region14: #{residual_mlp_pallas.1} parent=0 // pred_check
    _
  $region15: #{residual_mlp_pallas.1} parent=0 // pred_check_branch
    %17 = sbr.rel (0) target = $region17
  $region16: #{residual_mlp_pallas.1} parent=0 // pred_region
    _
  $region17: #{residual_mlp_pallas.1} parent=0 // pred_fallthru
    _
  // Predicated region
  $region18: #{residual_mlp_pallas.1} parent=0 // pred_check
    _
  $region19: #{residual_mlp_pallas.1} parent=0 // pred_check_branch
    %19 = sbr.rel (0) target = $region21
  $region20: #{residual_mlp_pallas.1} parent=0 // pred_region
    _
  $region21: #{residual_mlp_pallas.1} parent=0 // pred_fallthru
    _
  %v20 = vld [vmem:[%s0] sm:$0xff]
  %v21 = vld [vmem:[%s0 + $0x8] sm:$0xff]
  %v22 = vpack.c.bf16 %v21, %v20
  %v23 = vld [vmem:[%s1] sm:$0xf]
  %v24 = vld [vmem:[%s1 + $0x4] sm:$0xf]
  %v25 = vld [vmem:[%s1 + $0x8] sm:$0xf]
  %v26 = vld [vmem:[%s1 + $0xc] sm:$0xf]
  %v27 = vld [vmem:[%s1 + $0x10] sm:$0xf]
  %v28 = vld [vmem:[%s1 + $0x14] sm:$0xf]
  %v29 = vld [vmem:[%s1 + $0x18] sm:$0xf]
  %v30 = vld [vmem:[%s1 + $0x1c] sm:$0xf]
  %v31 = vld [vmem:[%s1 + $0x20] sm:$0xf]
  %v32 = vld [vmem:[%s1 + $0x24] sm:$0xf]
  %v33 = vld [vmem:[%s1 + $0x28] sm:$0xf]
  %v34 = vld [vmem:[%s1 + $0x2c] sm:$0xf]
  %v35 = vld [vmem:[%s1 + $0x30] sm:$0xf]
  %v36 = vld [vmem:[%s1 + $0x34] sm:$0xf]
  %v37 = vld [vmem:[%s1 + $0x38] sm:$0xf]
  %v38 = vld [vmem:[%s1 + $0x3c] sm:$0xf]
  %v39 = vld [vmem:[%s2] sm:$0x1]
  %v41 = vperm.slane %v39, 0
  %v59 = vunpack.c.l.b16 %v23
  %v60 = vunpack.c.l.b16 %v24
  %v61 = vunpack.c.l.b16 %v25
  %v62 = vunpack.c.l.b16 %v26
  %v63 = vunpack.c.l.b16 %v27
  %v64 = vunpack.c.l.b16 %v28
  %v65 = vunpack.c.l.b16 %v29
  %v66 = vunpack.c.l.b16 %v30
  %v67 = vunpack.c.l.b16 %v31
  %v68 = vunpack.c.l.b16 %v32
  %v69 = vunpack.c.l.b16 %v33
  %v70 = vunpack.c.l.b16 %v34
  %v71 = vunpack.c.l.b16 %v35
  %v72 = vunpack.c.l.b16 %v36
  %v73 = vunpack.c.l.b16 %v37
  %v74 = vunpack.c.l.b16 %v38
  %v75 = vpack.c.b16 %v60, %v59
  %v76 = vpack.c.b16 %v62, %v61
  %v77 = vpack.c.b16 %v64, %v63
  %v78 = vpack.c.b16 %v66, %v65
  %v79 = vpack.c.b16 %v68, %v67
  %v80 = vpack.c.b16 %v70, %v69
  %v81 = vpack.c.b16 %v72, %v71
  %v82 = vpack.c.b16 %v74, %v73
  %91 = vmatpush.bf16.msra.mxu0 %v82
  %92 = vmatpush.bf16.msra.mxu0 %v81
  %93 = vmatpush.bf16.msra.mxu0 %v80
  %94 = vmatpush.bf16.msra.mxu0 %v79
  %95 = vmatpush.bf16.msra.mxu0 %v78
  %96 = vmatpush.bf16.msra.mxu0 %v77
  %97 = vmatpush.bf16.msra.mxu0 %v76
  %98 = vmatpush.bf16.msra.mxu0 %v75
  %99 = vmatmul.bf16.gmra.mxu0 %v22
  %v100 = vpop.f32.mrf.mxu0
  %v101 = vadd.f32 %v41, %v100
  %v102 = vpop.f32.mrf.mxu0
  %v103 = vadd.f32 %v41, %v102
  %104 = vdwg.mxu0
  %v105 = vmul.f32 %v101, %v101
  %v106 = vmul.f32 %v103, %v103
  %v107 = vmul.f32 %v101, %v105
  %v108 = vmul.f32 %v103, %v106
  %v109 = vmul.f32 %v107, 0.044715
  %v110 = vmul.f32 %v108, 0.044715
  %v111 = vadd.f32 %v101, %v109
  %v112 = vadd.f32 %v103, %v110
  %v113 = vmul.f32 %v111, 0.7978846
  %v114 = vmul.f32 %v112, 0.7978846
  %v115 = vtanh.pop %v113
  %v116 = vtanh.pop %v114
  %v117 = vadd.f32 %v115, 1.0
  %v118 = vadd.f32 %v116, 1.0
  %v119 = vmul.f32 %v117, 0.5
  %v120 = vmul.f32 %v118, 0.5
  %v121 = vmul.f32 %v101, %v119
  %v122 = vmul.f32 %v103, %v120
  %v123 = vpack.c.bf16 %v122, %v121
  %v124 = vld [vmem:[%s3] sm:$0xf]
  %v125 = vld [vmem:[%s3 + $0x4] sm:$0xf]
  %v126 = vld [vmem:[%s3 + $0x8] sm:$0xf]
  %v127 = vld [vmem:[%s3 + $0xc] sm:$0xf]
  %v128 = vld [vmem:[%s3 + $0x10] sm:$0xf]
  %v129 = vld [vmem:[%s3 + $0x14] sm:$0xf]
  %v130 = vld [vmem:[%s3 + $0x18] sm:$0xf]
  %v131 = vld [vmem:[%s3 + $0x1c] sm:$0xf]
  %v132 = vld [vmem:[%s3 + $0x20] sm:$0xf]
  %v133 = vld [vmem:[%s3 + $0x24] sm:$0xf]
  %v134 = vld [vmem:[%s3 + $0x28] sm:$0xf]
  %v135 = vld [vmem:[%s3 + $0x2c] sm:$0xf]
  %v136 = vld [vmem:[%s3 + $0x30] sm:$0xf]
  %v137 = vld [vmem:[%s3 + $0x34] sm:$0xf]
  %v138 = vld [vmem:[%s3 + $0x38] sm:$0xf]
  %v139 = vld [vmem:[%s3 + $0x3c] sm:$0xf]
  %v140 = vld [vmem:[%s4] sm:$0x1]
  %v142 = vperm.slane %v140, 0
  %v160 = vunpack.c.l.b16 %v124
  %v161 = vunpack.c.l.b16 %v125
  %v162 = vunpack.c.l.b16 %v126
  %v163 = vunpack.c.l.b16 %v127
  %v164 = vunpack.c.l.b16 %v128
  %v165 = vunpack.c.l.b16 %v129
  %v166 = vunpack.c.l.b16 %v130
  %v167 = vunpack.c.l.b16 %v131
  %v168 = vunpack.c.l.b16 %v132
  %v169 = vunpack.c.l.b16 %v133
  %v170 = vunpack.c.l.b16 %v134
  %v171 = vunpack.c.l.b16 %v135
  %v172 = vunpack.c.l.b16 %v136
  %v173 = vunpack.c.l.b16 %v137
  %v174 = vunpack.c.l.b16 %v138
  %v175 = vunpack.c.l.b16 %v139
  %v176 = vpack.c.b16 %v161, %v160
  %v177 = vpack.c.b16 %v163, %v162
  %v178 = vpack.c.b16 %v165, %v164
  %v179 = vpack.c.b16 %v167, %v166
  %v180 = vpack.c.b16 %v169, %v168
  %v181 = vpack.c.b16 %v171, %v170
  %v182 = vpack.c.b16 %v173, %v172
  %v183 = vpack.c.b16 %v175, %v174
  %192 = vmatpush.bf16.msra.mxu0 %v183
  %193 = vmatpush.bf16.msra.mxu0 %v182
  %194 = vmatpush.bf16.msra.mxu0 %v181
  %195 = vmatpush.bf16.msra.mxu0 %v180
  %196 = vmatpush.bf16.msra.mxu0 %v179
  %197 = vmatpush.bf16.msra.mxu0 %v178
  %198 = vmatpush.bf16.msra.mxu0 %v177
  %199 = vmatpush.bf16.msra.mxu0 %v176
  %200 = vmatmul.bf16.gmra.mxu0 %v123
  %v201 = vpop.f32.mrf.mxu0
  %v202 = vadd.f32 %v142, %v201
  %v203 = vpop.f32.mrf.mxu0
  %v204 = vadd.f32 %v142, %v203
  %205 = vdwg.mxu0
  %v206 = vadd.f32 %v202, %v20
  %v207 = vadd.f32 %v204, %v21
  %208 = vst [vmem:[%s5] sm:$0xff] %v206
  %209 = vst [vmem:[%s5 + $0x8] sm:$0xff] %v207
  // Predicated region
  $region22: #{residual_mlp_pallas.1} parent=0 // pred_check
    _
  $region23: #{residual_mlp_pallas.1} parent=0 // pred_check_branch
    %211 = sbr.rel (0) target = $region25
  $region24: #{residual_mlp_pallas.1} parent=0 // pred_region
    _
  $region25: #{residual_mlp_pallas.1} parent=0 // pred_fallthru
    _
  // Predicated region
  $region26: #{residual_mlp_pallas.1} parent=0 // pred_check
    _
  $region27: #{residual_mlp_pallas.1} parent=0 // pred_check_branch
    %213 = sbr.rel (0) target = $region29
  $region28: #{residual_mlp_pallas.1} parent=0 // pred_region
    _
  $region29: #{residual_mlp_pallas.1} parent=0 // pred_fallthru
    _

</llo_original>
